<compile_context>
chip_gen: v6e
topology: v6e:2x2x1
jax: 0.10.0
libtpu: 0.0.40
codegen_flags: <defaults>
</compile_context>

<pallas_src>
import functools

import jax
import jax.numpy as jnp
from jax.experimental import pallas as pl
from jax.experimental.pallas import tpu as pltpu


def _round_up(n, m):
    return ((n + m - 1) // m) * m


# --------------------------------------------------------------------------- #
# Kernels
# --------------------------------------------------------------------------- #
def _gemm_bias_kernel(x_ref, w_ref, b_ref, o_ref):
    """out[tile] = x[tile] @ W + bias  (whole reduction in one MXU pass)."""
    acc = jnp.dot(x_ref[...], w_ref[...], preferred_element_type=jnp.float32)
    o_ref[...] = (acc + b_ref[...]).astype(o_ref.dtype)


def _gemm_bias_ktiled_kernel(x_ref, w_ref, b_ref, o_ref, acc_ref):
    """Reduction-tiled variant: K*L split over grid axis 1 ('arbitrary'),
    f32 VMEM accumulator, bias folded in on the last reduction step."""
    @pl.when(pl.program_id(1) == 0)
    def _():
        acc_ref[...] = jnp.zeros_like(acc_ref)

    acc_ref[...] += jnp.dot(x_ref[...], w_ref[...],
                            preferred_element_type=jnp.float32)

    @pl.when(pl.program_id(1) == pl.num_programs(1) - 1)
    def _():
        o_ref[...] = (acc_ref[...] + b_ref[...]).astype(o_ref.dtype)


# --------------------------------------------------------------------------- #
# Parameter-only operator precompute (cache this across inference calls).
# --------------------------------------------------------------------------- #
def precompute_seasonal_operator(params, seq_len):
    """Exact real (K*L, P) matrix of irfft(rfft(.) @ fno) folded with
    Conv1d(K->1, kernel=3, padding=1), plus the conv bias scalar.

    The spectral pipeline is real-linear in the input, so applying it to the
    identity basis yields its exact matrix M (L, P).  The 3-tap conv that mixes
    the K channels into one output channel is then folded in per channel:
        W_k[t_in, t_out] = sum_j w[0, k, j] * M[t_in, t_out + j - 1]  (zero pad)
    Pure parameter glue -- independent of the batch input.
    """
    fno = params["fno"]
    conv_w = params["out_proj_weight"]       # (1, K, 3)
    conv_b = params["out_proj_bias"]         # (1,)
    L = seq_len
    assert fno.shape[0] == L // 2 + 1, "fno rows must equal seq_len//2 + 1"

    basis = jnp.eye(L, dtype=jnp.float32)
    m = jnp.fft.irfft(jnp.fft.rfft(basis, axis=-1) @ fno, axis=-1)   # (L, P)
    m = jnp.real(m).astype(jnp.float32)
    P = m.shape[-1]                                    # 2 * (pred_len // 2)

    K = conv_w.shape[1]
    mp = jnp.pad(m, ((0, 0), (1, 1)))                                # (L, P+2)
    taps = jnp.stack([mp[:, j:j + P] for j in range(3)], axis=0)     # (3, L, P)
    w = jnp.einsum("kj,jlp->klp", conv_w[0].astype(jnp.float32), taps)
    return w.reshape(K * L, P), conv_b.reshape(()).astype(jnp.float32)


# --------------------------------------------------------------------------- #
# Fused forward
# --------------------------------------------------------------------------- #
_W_RESIDENT_LIMIT = 24 << 20   # above this, tile the reduction (v7x VMEM = 64 MiB)
_KL_TILE = 2048                # reduction block for the K-tiled fallback


def seasonal_predict_forward(x, params=None, *, pred_len,
                             use_bf16_matmul=True, operator=None):
    """Pallas-fused forward of SeasonalPredict.

    x: (B, D, K, L) real.  Returns (B*D, 1, min(pred_len, 2*(pred_len//2))),
    identical to the torch module's `out[:, :, -pred_len:]`.
    """
    B, D, K, L = x.shape
    N, KL = B * D, K * L

    if operator is None:
        operator = precompute_seasonal_operator(params, L)
    W, bias = operator                        # (KL, P) f32, scalar f32
    P = W.shape[-1]                           # == 2 * (pred_len // 2)

    mm_dtype = jnp.bfloat16 if use_bf16_matmul else jnp.float32
    elem = 2 if use_bf16_matmul else 4

    # ---- tiling plan --------------------------------------------------------
    p_pad = _round_up(P, 128)                 # lane-dense output -> unmasked vst
    if N >= 256:
        row_tile = 256                        # fills the 256-wide MXU M dim (v6e/v7x)
    elif N >= 128:
        row_tile = 128
    else:
        # bf16 packs two rows per sublane -> round tiny batches to 16 rows.
        row_tile = _round_up(N, 16 if use_bf16_matmul else 8)
    n_pad = _round_up(N, row_tile)

    w_bytes = KL * p_pad * elem
    k_tiled = w_bytes > _W_RESIDENT_LIMIT
    if k_tiled:
        kl_tile = min(_KL_TILE, _round_up(KL, 128))
        kl_pad = _round_up(KL, kl_tile)
        k_steps = kl_pad // kl_tile
    else:
        kl_tile = kl_pad = KL                 # full-extent block: no zero padding
        k_steps = 1

    # ---- operand layout (at most one copy of x: the bf16 cast / row pad) ----
    lhs = x.reshape(N, KL).astype(mm_dtype)
    if (n_pad, kl_pad) != (N, KL):
        lhs = jnp.pad(lhs, ((0, n_pad - N), (0, kl_pad - KL)))
    rhs = W.astype(mm_dtype)
    if (kl_pad, p_pad) != (KL, P):
        rhs = jnp.pad(rhs, ((0, kl_pad - KL), (0, p_pad - P)))
    bias_row = jnp.zeros((1, p_pad), jnp.float32).at[0, :P].set(bias)

    # ---- VMEM budget (weight single-buffered on the resident path) ----------
    x_tile_b = row_tile * kl_tile * elem
    w_tile_b = kl_tile * p_pad * elem
    o_tile_b = row_tile * p_pad * 4
    acc_b = row_tile * p_pad * 4 if k_tiled else 0
    need = (2 * x_tile_b + (2 if k_tiled else 1) * w_tile_b
            + 2 * o_tile_b + p_pad * 4 + acc_b)
    try:
        vmem_cap = pltpu.get_tpu_info().vmem_capacity_bytes
    except Exception:
        vmem_cap = 64 << 20                   # conservative (v7x per-core VMEM)
    vmem_limit = int(min(max(1.25 * need + (4 << 20), 32 << 20), 0.8 * vmem_cap))

    cost = pl.CostEstimate(
        flops=2 * n_pad * kl_pad * p_pad,
        transcendentals=0,
        bytes_accessed=(n_pad * kl_pad * elem + kl_pad * p_pad * elem
                        + n_pad * p_pad * 4 + p_pad * 4))

    if not k_tiled:
        grid = (n_pad // row_tile,)
        kernel = _gemm_bias_kernel
        in_specs = [
            pl.BlockSpec((row_tile, KL), lambda i: (i, 0)),           # x row tile
            # constant index_map -> single buffer (halves W's VMEM footprint)
            pl.BlockSpec((KL, p_pad), lambda i: (0, 0),
                         pipeline_mode=pl.Buffered(1)),               # resident W
            pl.BlockSpec((1, p_pad), lambda i: (0, 0),
                         pipeline_mode=pl.Buffered(1)),               # bias row
        ]
        out_specs = pl.BlockSpec((row_tile, p_pad), lambda i: (i, 0))
        scratch = []
        dims = ("parallel",)
    else:
        grid = (n_pad // row_tile, k_steps)
        kernel = _gemm_bias_ktiled_kernel
        in_specs = [
            pl.BlockSpec((row_tile, kl_tile), lambda i, k: (i, k)),
            pl.BlockSpec((kl_tile, p_pad), lambda i, k: (k, 0)),
            pl.BlockSpec((1, p_pad), lambda i, k: (0, 0),
                         pipeline_mode=pl.Buffered(1)),
        ]
        out_specs = pl.BlockSpec((row_tile, p_pad), lambda i, k: (i, 0))
        scratch = [pltpu.VMEM((row_tile, p_pad), jnp.float32)]
        dims = ("parallel", "arbitrary")

    # TODO(synk): on v7x, if xprof shows one TensorCore idle, switch the batch
    # axis to pltpu.CORE_PARALLEL (W duplicated per-core or in VMEM_SHARED).
    out = pl.pallas_call(
        kernel,
        out_shape=jax.ShapeDtypeStruct((n_pad, p_pad), jnp.float32),
        grid_spec=pltpu.PrefetchScalarGridSpec(
            num_scalar_prefetch=0,
            grid=grid,
            in_specs=in_specs,
            out_specs=out_specs,
            scratch_shapes=scratch,
        ),
        compiler_params=pltpu.CompilerParams(
            dimension_semantics=dims,
            vmem_limit_bytes=vmem_limit,
        ),
        cost_estimate=cost,
    )(lhs, rhs, bias_row)

    out = out[:N, :P]
    start = max(P - pred_len, 0)              # == torch `out[:, :, -pred_len:]`
    return out[:, None, start:].astype(x.dtype)


if __name__ == "__main__":
    # Small deterministic demo: B=2, D=4, k=4 channels, seq_len=16, pred_len=8
    #   x: (2, 4, 4, 16)  ->  output: (8, 1, 8)
    B, D, K, L = 2, 4, 4, 16
    pred_len = 8

    key = jax.random.PRNGKey(0)
    kx, kfr, kfi, kw, kb = jax.random.split(key, 5)

    x = jax.random.normal(kx, (B, D, K, L), jnp.float32)

    f_in, f_out = L // 2 + 1, pred_len // 2 + 1
    fno = (0.02 * (jax.random.normal(kfr, (f_in, f_out), jnp.float32)
                   + 1j * jax.random.normal(kfi, (f_in, f_out), jnp.float32))
           ).astype(jnp.complex64)
    bound = 1.0 / (K * 3) ** 0.5              # torch Conv1d default init bound
    params = dict(
        fno=fno,
        out_proj_weight=jax.random.uniform(kw, (1, K, 3), jnp.float32, -bound, bound),
        out_proj_bias=jax.random.uniform(kb, (1,), jnp.float32, -bound, bound),
    )

    # Precompute the parameter-only operator once (inference: reuse across calls).
    operator = precompute_seasonal_operator(params, L)
    fwd = jax.jit(functools.partial(
        seasonal_predict_forward, pred_len=pred_len, operator=operator))
    out = jax.block_until_ready(fwd(x))
    assert out.shape == (B * D, 1, pred_len), out.shape
    assert bool(jnp.all(jnp.isfinite(out)))

    # Pure-JAX reference mirroring the torch forward exactly (sanity check).
    xr = x.reshape(B * D, K, L)
    x_fft = jnp.fft.rfft(xr, axis=-1)
    out_fft = jnp.einsum("bcx,xl->bcl", x_fft, fno)
    y = jnp.fft.irfft(out_fft, axis=-1)                        # (N, K, P)
    yp = jnp.pad(y, ((0, 0), (0, 0), (1, 1)))
    w = params["out_proj_weight"][0]                           # (K, 3)
    conv = sum(w[:, j][None, :, None] * yp[:, :, j:j + y.shape[-1]]
               for j in range(3))
    ref = conv.sum(axis=1, keepdims=True) + params["out_proj_bias"][0]
    ref = ref[:, :, -pred_len:]

    # Default path uses bf16 MXU operands -> bf16-appropriate tolerance.
    err = float(jnp.max(jnp.abs(out - ref)))
    assert err < 3e-2, f"bf16 path max abs err vs reference = {err}"

    # Exactness check of the f32-operand path.
    out32 = jax.block_until_ready(seasonal_predict_forward(
        x, params, pred_len=pred_len, use_bf16_matmul=False))
    err32 = float(jnp.max(jnp.abs(out32 - ref)))
    assert err32 < 1e-4, f"f32 path max abs err vs reference = {err32}"

    print("KERNEL_OK")
</pallas_src>

<mosaic_0001>
module attributes {stable_mosaic.version = 11 : i64} {
  func.func @_gemm_bias_kernel(%arg0: i32, %arg1: memref<16x64xbf16, #tpu.memory_space<vmem>>, %arg2: memref<64x128xbf16, #tpu.memory_space<vmem>>, %arg3: memref<1x128xf32, #tpu.memory_space<vmem>>, %arg4: memref<16x128xf32, #tpu.memory_space<vmem>>) attributes {dimension_semantics = [#tpu.dimension_semantics<parallel>], iteration_bounds = array<i64: 1>, scalar_prefetch = 0 : i64, scratch_operands = 0 : i64, tpu.core_type = #tpu.core_type<tc>, window_params = [{transform_indices = @transform_0, window_bounds = array<i64: 16, 64>}, {pipeline_mode = #tpu.pipeline_mode<synchronous>, transform_indices = @transform_1, window_bounds = array<i64: 64, 128>}, {pipeline_mode = #tpu.pipeline_mode<synchronous>, transform_indices = @transform_2, window_bounds = array<i64: 1, 128>}, {transform_indices = @transform_3, window_bounds = array<i64: 16, 128>}]} {
    %c0 = arith.constant 0 : index
    %c0_0 = arith.constant 0 : index
    %0 = vector.load %arg1[%c0, %c0_0] : memref<16x64xbf16, #tpu.memory_space<vmem>>, vector<16x64xbf16>
    %c0_1 = arith.constant 0 : index
    %c0_2 = arith.constant 0 : index
    %1 = vector.load %arg2[%c0_1, %c0_2] : memref<64x128xbf16, #tpu.memory_space<vmem>>, vector<64x128xbf16>
    %cst = arith.constant dense<0.000000e+00> : vector<16x128xf32>
    %2 = tpu.matmul %0, %1, %cst {dimension_numbers = #tpu.dot_dimension_numbers<[1], [0], [0], [1], [0, 0, 1, 1], [], []>} : vector<16x64xbf16>, vector<64x128xbf16>, vector<16x128xf32> -> vector<16x128xf32>
    %c0_3 = arith.constant 0 : index
    %c0_4 = arith.constant 0 : index
    %3 = vector.load %arg3[%c0_3, %c0_4] : memref<1x128xf32, #tpu.memory_space<vmem>>, vector<1x128xf32>
    %4 = vector.broadcast %3 : vector<1x128xf32> to vector<16x128xf32>
    %5 = arith.addf %2, %4 : vector<16x128xf32>
    %c0_5 = arith.constant 0 : index
    %c0_6 = arith.constant 0 : index
    %6 = vector.load %arg4[%c0_5, %c0_6] : memref<16x128xf32, #tpu.memory_space<vmem>>, vector<16x128xf32>
    tpu.vector_store %arg4[%c0_5, %c0_6], %5 {strides = array<i32>} : memref<16x128xf32, #tpu.memory_space<vmem>>, vector<16x128xf32>,
    return
  }
  func.func @transform_0(%arg0: i32) -> (i32, i32) {
    %c0_i32 = arith.constant 0 : i32
    %c0_i32_0 = arith.constant 0 : i32
    return %arg0, %c0_i32 : i32, i32
  }
  func.func @transform_1(%arg0: i32) -> (i32, i32) {
    %c0_i32 = arith.constant 0 : i32
    %c0_i32_0 = arith.constant 0 : i32
    %c0_i32_1 = arith.constant 0 : i32
    return %c0_i32, %c0_i32_0 : i32, i32
  }
  func.func @transform_2(%arg0: i32) -> (i32, i32) {
    %c0_i32 = arith.constant 0 : i32
    %c0_i32_0 = arith.constant 0 : i32
    %c0_i32_1 = arith.constant 0 : i32
    return %c0_i32, %c0_i32_0 : i32, i32
  }
  func.func @transform_3(%arg0: i32) -> (i32, i32) {
    %c0_i32 = arith.constant 0 : i32
    %c0_i32_0 = arith.constant 0 : i32
    return %arg0, %c0_i32 : i32, i32
  }
}

</mosaic_0001>

<llo_original>
// kernel: seasonal_predict_forward.1
$region0: #{seasonal_predict_forward.1}
  #allocation0 [shape = 'u32[]', space=smem, size = 0x4, offset = 0x4, fixed_abs, tag = 'smem constant byte address 0x4 - core index']
  #allocation1 [shape = 'u32[144,128]{1,0:T(1,128)}', space=vmem, size = 0x12000, scoped, tag = 'internal scratch']
  %s0 = inlined_call_operand.vmem [shape: bf16[16,64], index: 0, kind: input, shape index: {}]
  %s1 = inlined_call_operand.vmem [shape: bf16[64,128], index: 1, kind: input, shape index: {}]
  %s2 = inlined_call_operand.vmem [shape: f32[1,128], index: 2, kind: input, shape index: {}]
  %s3 = inlined_call_operand.vmem [shape: f32[16,128], index: 3, kind: output, shape index: {}]
  %s4 = sld [smem:[#allocation0]]
  $region22: #{seasonal_predict_forward.1} parent=0
    _
  %s6 = ssub.s32 1, %s4
  %s7 = scalar_select 0, %s6, %s4
  // Predicated region
  $region2: #{seasonal_predict_forward.1} parent=0 // pred_check
    _
  $region3: #{seasonal_predict_forward.1} parent=0 // pred_check_branch
    %9 = sbr.rel (0) target = $region5
  $region4: #{seasonal_predict_forward.1} parent=0 // pred_region
    _
  $region5: #{seasonal_predict_forward.1} parent=0 // pred_fallthru
    _
  // Predicated region
  $region6: #{seasonal_predict_forward.1} parent=0 // pred_check
    _
  $region7: #{seasonal_predict_forward.1} parent=0 // pred_check_branch
    %11 = sbr.rel (0) target = $region9
  $region8: #{seasonal_predict_forward.1} parent=0 // pred_region
    _
  $region9: #{seasonal_predict_forward.1} parent=0 // pred_fallthru
    _
  // Predicated region
  $region10: #{seasonal_predict_forward.1} parent=0 // pred_check
    _
  $region11: #{seasonal_predict_forward.1} parent=0 // pred_check_branch
    %13 = sbr.rel (0) target = $region13
  $region12: #{seasonal_predict_forward.1} parent=0 // pred_region
    _
  $region13: #{seasonal_predict_forward.1} parent=0 // pred_fallthru
    _
  %v15 = vld [vmem:[%s0] sm:$0xf]
  %v16 = vld [vmem:[%s0 + $0x4] sm:$0xf]
  %v17 = vld [vmem:[%s1] sm:$0xf]
  %v18 = vld [vmem:[%s1 + $0x4] sm:$0xf]
  %v19 = vld [vmem:[%s1 + $0x8] sm:$0xf]
  %v20 = vld [vmem:[%s1 + $0xc] sm:$0xf]
  %v21 = vld [vmem:[%s1 + $0x10] sm:$0xf]
  %v22 = vld [vmem:[%s1 + $0x14] sm:$0xf]
  %v23 = vld [vmem:[%s1 + $0x18] sm:$0xf]
  %v24 = vld [vmem:[%s1 + $0x1c] sm:$0xf]
  %v25 = vld [vmem:[%s2] sm:$0x1]
  %v27 = vlaneseq
  %v28 = vshrl.u32 %v27, 7
  %v29 = vsub.s32 0, %v28
  %v30 = vrot.slane %v25, %v29
  %v34 = vunpack.c.l.b16 %v15
  %v35 = vunpack.c.l.b16 %v16
  %v36 = vpack.c.b16 %v35, %v34
  %v45 = vunpack.c.l.b16 %v17
  %v46 = vunpack.c.l.b16 %v18
  %v47 = vunpack.c.l.b16 %v19
  %v48 = vunpack.c.l.b16 %v20
  %v49 = vunpack.c.l.b16 %v21
  %v50 = vunpack.c.l.b16 %v22
  %v51 = vunpack.c.l.b16 %v23
  %v52 = vunpack.c.l.b16 %v24
  %v53 = vpack.c.b16 %v46, %v45
  %v54 = vpack.c.b16 %v48, %v47
  %v55 = vpack.c.b16 %v50, %v49
  %v56 = vpack.c.b16 %v52, %v51
  %vm61 = vcmask 523264
  %v63 = vsel %vm61, %v36, 0
  %65 = vmatprep.subr.bf16.mxu0 0
  %66 = vmatpush1.bf16.msra.mxu0 0
  %67 = vmatprep.subr.bf16.mxu0 0
  %68 = vmatpush1.bf16.msra.mxu0 0
  %69 = vmatprep.subr.bf16.mxu0 0
  %70 = vmatpush1.bf16.msra.mxu0 0
  %71 = vmatprep.subr.bf16.mxu0 0
  %72 = vmatpush1.bf16.msra.mxu0 0
  %73 = vmatprep.subr.bf16.mxu0 0
  %74 = vmatpush1.bf16.msra.mxu0 %v56
  %75 = vmatprep.subr.bf16.mxu0 0
  %76 = vmatpush1.bf16.msra.mxu0 %v55
  %77 = vmatprep.subr.bf16.mxu0 0
  %78 = vmatpush1.bf16.msra.mxu0 %v54
  %79 = vmatprep.subr.bf16.mxu0 0
  %80 = vmatpush1.bf16.msra.mxu0 %v53
  %81 = vmatprep.subr.bf16.mxu0 0
  %82 = vmatpush2.bf16.msra.mxu0 0
  %83 = vmatprep.subr.bf16.mxu0 0
  %84 = vmatpush2.bf16.msra.mxu0 0
  %85 = vmatprep.subr.bf16.mxu0 0
  %86 = vmatpush2.bf16.msra.mxu0 0
  %87 = vmatprep.subr.bf16.mxu0 0
  %88 = vmatpush2.bf16.msra.mxu0 0
  %89 = vmatprep.subr.bf16.mxu0 0
  %90 = vmatpush2.bf16.msra.mxu0 0
  %91 = vmatprep.subr.bf16.mxu0 0
  %92 = vmatpush2.bf16.msra.mxu0 0
  %93 = vmatprep.subr.bf16.mxu0 0
  %94 = vmatpush2.bf16.msra.mxu0 0
  %95 = vmatprep.subr.bf16.mxu0 0
  %96 = vmatpush2.bf16.msra.mxu0 0
  %97 = vmatprep.mubr.bf16.mxu0 0
  %98 = vmatmul.mubr.bf16.gmra.mxu0 %v63
  %v99 = vpop.f32.mrf.mxu0
  %v100 = vadd.f32 %v30, %v99
  %v101 = vpop.f32.mrf.mxu0
  %v102 = vpop.f32.mrf.mxu0
  %v103 = vadd.f32 %v30, %v102
  %v104 = vpop.f32.mrf.mxu0
  %105 = vdwg.mxu0
  %106 = vst [vmem:[%s3] sm:$0xff] %v100
  %107 = vst [vmem:[%s3 + $0x8] sm:$0xff] %v103
  // Predicated region
  $region14: #{seasonal_predict_forward.1} parent=0 // pred_check
    _
  $region15: #{seasonal_predict_forward.1} parent=0 // pred_check_branch
    %109 = sbr.rel (0) target = $region17
  $region16: #{seasonal_predict_forward.1} parent=0 // pred_region
    _
  $region17: #{seasonal_predict_forward.1} parent=0 // pred_fallthru
    _
  // Predicated region
  $region18: #{seasonal_predict_forward.1} parent=0 // pred_check
    _
  $region19: #{seasonal_predict_forward.1} parent=0 // pred_check_branch
    %111 = sbr.rel (0) target = $region21
  $region20: #{seasonal_predict_forward.1} parent=0 // pred_region
    _
  $region21: #{seasonal_predict_forward.1} parent=0 // pred_fallthru
    _

</llo_original>
